<compile_context>
chip_gen: v5e
topology: v5e:2x2
jax: 0.10.0
libtpu: 0.0.40
codegen_flags: <defaults>
</compile_context>

<pallas_src>
import jax
import jax.numpy as jnp
from jax.experimental import pallas as pl
from jax.experimental.pallas import tpu as pltpu


def critic_kernel(state_ref, action_ref, w1s_t_ref, w1a_t_ref, b1_ref,
                  w2_t_ref, b2_ref, wq_ref, bq_ref, q_ref):
    cdt = w1s_t_ref.dtype                      # MXU operand dtype (bf16 by default)
    dn = (((1,), (1,)), ((), ()))              # contract minor of both: (F,K)x(T,K)->(F,T)

    # fc1 as a split-K matmul over [state | action]; torch.cat never
    # materializes. Output is feature-major (fc1, tile) so everything
    # downstream keeps the batch rows in the lane dimension.
    h1 = jax.lax.dot_general(w1s_t_ref[...], state_ref[...].astype(cdt), dn,
                             preferred_element_type=jnp.float32)
    h1 = h1 + jax.lax.dot_general(w1a_t_ref[...], action_ref[...].astype(cdt), dn,
                                  preferred_element_type=jnp.float32)
    h1 = jnp.maximum(h1 + b1_ref[...], 0.0)    # bias + ReLU in f32

    # fc2 + ReLU: (fc2, fc1) @ (fc1, tile) -> (fc2, tile)
    h2 = jnp.dot(w2_t_ref[...], h1.astype(cdt), preferred_element_type=jnp.float32)
    h2 = jnp.maximum(h2 + b2_ref[...], 0.0)

    # q head (out_features = 1): VPU multiply + sublane reduce. The (1, tile)
    # result is lane-dense -> unmasked dense store / dense writeback DMA.
    q = jnp.sum(h2 * wq_ref[...], axis=0, keepdims=True) + bq_ref[...]
    q_ref[...] = q.astype(q_ref.dtype)


def _round_up(x, m):
    return ((x + m - 1) // m) * m


def _choose_tile(B, tile_b):
    """Batch-tile selection.

    Invariants: tile % 8 == 0, and either tile % 128 == 0 or the grid has a
    single step, so the batch-tiled input blocks and the (1, tile) output row
    block both satisfy Mosaic's (8, 128) block constraints.
    """
    tile_b = max(8, (int(tile_b) // 8) * 8)    # defensive: multiple of 8
    tile_b = min(tile_b, 8192)                 # v7x (64 MiB VMEM) headroom cap
    b8 = _round_up(B, 8)
    if b8 <= 128:
        return b8                              # single block; lane dim == full dim
    tile = max(128, (min(tile_b, b8) // 128) * 128)
    if tile >= b8:
        # Keep >= 2 grid steps so both v7x TensorCores get work on the
        # "parallel" batch axis (no-op cost on single-TC v5e/v6e).
        half = _round_up(-(-b8 // 2), 128)
        if half < b8:
            tile = half
    return tile


def prepare_params(params, *, state_dim, compute_dtype=jnp.bfloat16):
    """One-time layout/dtype prep (hoisted out of the per-call path).

    Weights are stored transposed (feature-major) and cast once to the MXU
    compute dtype; biases and the q head stay f32. fc1's weight is split so
    state/action never have to be concatenated.
    """
    w1, w2, wq = params["w1"], params["w2"], params["wq"]
    return {
        "w1_s_t": jnp.asarray(w1[:state_dim].T, compute_dtype),           # (fc1, sd)
        "w1_a_t": jnp.asarray(w1[state_dim:].T, compute_dtype),           # (fc1, ad)
        "b1":     jnp.asarray(params["b1"].reshape(-1, 1), jnp.float32),  # (fc1, 1)
        "w2_t":   jnp.asarray(w2.T, compute_dtype),                       # (fc2, fc1)
        "b2":     jnp.asarray(params["b2"].reshape(-1, 1), jnp.float32),  # (fc2, 1)
        "wq":     jnp.asarray(wq.reshape(-1, 1), jnp.float32),            # (fc2, 1)
        "bq":     jnp.asarray(params["bq"].reshape(1, 1), jnp.float32),   # (1, 1)
    }


def critic_forward(state, action, prepared, *, tile_b=4096):
    """state: (B, state_dim), action: (B, action_dim) -> q: (B, 1) float32."""
    B, state_dim = state.shape
    action_dim = action.shape[1]
    assert prepared["w1_s_t"].shape[1] == state_dim
    assert prepared["w1_a_t"].shape[1] == action_dim

    fc1_dim = prepared["w1_s_t"].shape[0]
    fc2_dim = prepared["w2_t"].shape[0]
    in_dims = state_dim + action_dim

    tile = _choose_tile(B, tile_b)
    nblk = pl.cdiv(B, tile)

    def const(arr):
        # Same block every grid step -> DMA'd once, resident in VMEM.
        return pl.BlockSpec(arr.shape, lambda i: (0, 0))

    s_bytes = jnp.dtype(state.dtype).itemsize
    a_bytes = jnp.dtype(action.dtype).itemsize
    flops = 2 * B * (in_dims * fc1_dim + fc1_dim * fc2_dim + fc2_dim)
    bytes_accessed = (B * (state_dim * s_bytes + action_dim * a_bytes + 4)
                      + 2 * (in_dims * fc1_dim + fc1_dim * fc2_dim)
                      + 4 * (fc1_dim + fc2_dim + fc2_dim + 1))

    q_rows = pl.pallas_call(
        critic_kernel,
        out_shape=jax.ShapeDtypeStruct((1, nblk * tile), jnp.float32),
        grid=(nblk,),
        in_specs=[
            # Batch-tiled streams. If the input DMA is ever exposed, the next
            # knob is pipeline_mode=pl.Buffered(3) on these two specs.
            pl.BlockSpec((tile, state_dim), lambda i: (i, 0)),
            pl.BlockSpec((tile, action_dim), lambda i: (i, 0)),
            const(prepared["w1_s_t"]),
            const(prepared["w1_a_t"]),
            const(prepared["b1"]),
            const(prepared["w2_t"]),
            const(prepared["b2"]),
            const(prepared["wq"]),
            const(prepared["bq"]),
        ],
        out_specs=pl.BlockSpec((1, tile), lambda i: (0, i)),
        compiler_params=pltpu.CompilerParams(
            dimension_semantics=("parallel",)),
        cost_estimate=pl.CostEstimate(flops=flops, transcendentals=0,
                                      bytes_accessed=bytes_accessed),
    )(state, action, prepared["w1_s_t"], prepared["w1_a_t"], prepared["b1"],
      prepared["w2_t"], prepared["b2"], prepared["wq"], prepared["bq"])

    # Ragged / padded columns (>= B) hold garbage from boundary blocks; slice off.
    return q_rows[0, :B].reshape(B, 1)


def init_params(key, input_dims, fc1_dim=64, fc2_dim=64):
    """Deterministic init mimicking nn.Linear's U(-1/sqrt(fan_in), +1/sqrt(fan_in))."""
    ks = jax.random.split(key, 6)

    def linear(kw, kb, fan_in, fan_out):
        bound = 1.0 / float(jnp.sqrt(jnp.float32(fan_in)))
        w = jax.random.uniform(kw, (fan_in, fan_out), jnp.float32, -bound, bound)
        b = jax.random.uniform(kb, (fan_out,), jnp.float32, -bound, bound)
        return w, b

    w1, b1 = linear(ks[0], ks[1], input_dims, fc1_dim)
    w2, b2 = linear(ks[2], ks[3], fc1_dim, fc2_dim)
    wq, bq = linear(ks[4], ks[5], fc2_dim, 1)
    return {"w1": w1, "b1": b1, "w2": w2, "b2": b2, "wq": wq, "bq": bq}


def critic_reference(state, action, params):
    x = jnp.concatenate([state, action], axis=1)
    x = jax.nn.relu(x @ params["w1"] + params["b1"])
    x = jax.nn.relu(x @ params["w2"] + params["b2"])
    return x @ params["wq"] + params["bq"]


if __name__ == "__main__":
    key = jax.random.PRNGKey(0)
    ks = jax.random.split(key, 5)

    state_dim, action_dim = 12, 4
    input_dims = state_dim + action_dim  # fc1 input == torch.cat([state, action], dim=1)

    params = init_params(ks[0], input_dims)                 # f32 "PyTorch" params
    prepared = prepare_params(params, state_dim=state_dim)  # bf16 MXU operands

    # Case 1: tiny f32 batch -> single grid step (lane dim == full array dim).
    B = 8
    state = jax.random.normal(ks[1], (B, state_dim), jnp.float32)
    action = jax.random.normal(ks[2], (B, action_dim), jnp.float32)
    q = jax.block_until_ready(critic_forward(state, action, prepared))
    q_ref = critic_reference(state, action, params)
    assert q.shape == (B, 1)
    # bf16 MXU operands (f32 accumulation) -> loosened tolerance vs f32 reference.
    assert jnp.allclose(q, q_ref, atol=5e-2, rtol=5e-2), "mismatch vs reference (B=8)"

    # Case 2: ragged bf16 batch -> multi-step grid, 128-aligned tiles, boundary
    # block handling (no pad), lane-dense row output.
    B2 = 300
    state2 = jax.random.normal(ks[3], (B2, state_dim), jnp.float32).astype(jnp.bfloat16)
    action2 = jax.random.normal(ks[4], (B2, action_dim), jnp.float32).astype(jnp.bfloat16)
    q2 = jax.block_until_ready(critic_forward(state2, action2, prepared, tile_b=256))
    q2_ref = critic_reference(state2.astype(jnp.float32), action2.astype(jnp.float32), params)
    assert q2.shape == (B2, 1)
    assert jnp.allclose(q2, q2_ref, atol=5e-2, rtol=5e-2), "mismatch vs reference (B=300)"

    print("KERNEL_OK")
</pallas_src>

<mosaic_0001>
module attributes {stable_mosaic.version = 11 : i64} {
  func.func @critic_kernel(%arg0: i32, %arg1: memref<8x12xf32, #tpu.memory_space<vmem>>, %arg2: memref<8x4xf32, #tpu.memory_space<vmem>>, %arg3: memref<64x12xbf16, #tpu.memory_space<vmem>>, %arg4: memref<64x4xbf16, #tpu.memory_space<vmem>>, %arg5: memref<64x1xf32, #tpu.memory_space<vmem>>, %arg6: memref<64x64xbf16, #tpu.memory_space<vmem>>, %arg7: memref<64x1xf32, #tpu.memory_space<vmem>>, %arg8: memref<64x1xf32, #tpu.memory_space<vmem>>, %arg9: memref<1x1xf32, #tpu.memory_space<vmem>>, %arg10: memref<1x8xf32, #tpu.memory_space<vmem>>) attributes {dimension_semantics = [#tpu.dimension_semantics<parallel>], iteration_bounds = array<i64: 1>, scalar_prefetch = 0 : i64, scratch_operands = 0 : i64, tpu.core_type = #tpu.core_type<tc>, window_params = [{transform_indices = @transform_0, window_bounds = array<i64: 8, 12>}, {transform_indices = @transform_1, window_bounds = array<i64: 8, 4>}, {pipeline_mode = #tpu.pipeline_mode<synchronous>, transform_indices = @transform_2, window_bounds = array<i64: 64, 12>}, {pipeline_mode = #tpu.pipeline_mode<synchronous>, transform_indices = @transform_3, window_bounds = array<i64: 64, 4>}, {pipeline_mode = #tpu.pipeline_mode<synchronous>, transform_indices = @transform_4, window_bounds = array<i64: 64, 1>}, {pipeline_mode = #tpu.pipeline_mode<synchronous>, transform_indices = @transform_5, window_bounds = array<i64: 64, 64>}, {pipeline_mode = #tpu.pipeline_mode<synchronous>, transform_indices = @transform_6, window_bounds = array<i64: 64, 1>}, {pipeline_mode = #tpu.pipeline_mode<synchronous>, transform_indices = @transform_7, window_bounds = array<i64: 64, 1>}, {pipeline_mode = #tpu.pipeline_mode<synchronous>, transform_indices = @transform_8, window_bounds = array<i64: 1, 1>}, {transform_indices = @transform_9, window_bounds = array<i64: 1, 8>}]} {
    %c0 = arith.constant 0 : index
    %c0_0 = arith.constant 0 : index
    %0 = vector.load %arg3[%c0, %c0_0] : memref<64x12xbf16, #tpu.memory_space<vmem>>, vector<64x12xbf16>
    %c0_1 = arith.constant 0 : index
    %c0_2 = arith.constant 0 : index
    %1 = vector.load %arg1[%c0_1, %c0_2] : memref<8x12xf32, #tpu.memory_space<vmem>>, vector<8x12xf32>
    %2 = arith.truncf %1 : vector<8x12xf32> to vector<8x12xbf16>
    %cst = arith.constant dense<0.000000e+00> : vector<64x8xf32>
    %3 = tpu.matmul %0, %2, %cst {dimension_numbers = #tpu.dot_dimension_numbers<[1], [1], [0], [0], [0, 0, 1, 0], [], []>} : vector<64x12xbf16>, vector<8x12xbf16>, vector<64x8xf32> -> vector<64x8xf32>
    %c0_3 = arith.constant 0 : index
    %c0_4 = arith.constant 0 : index
    %4 = vector.load %arg4[%c0_3, %c0_4] : memref<64x4xbf16, #tpu.memory_space<vmem>>, vector<64x4xbf16>
    %c0_5 = arith.constant 0 : index
    %c0_6 = arith.constant 0 : index
    %5 = vector.load %arg2[%c0_5, %c0_6] : memref<8x4xf32, #tpu.memory_space<vmem>>, vector<8x4xf32>
    %6 = arith.truncf %5 : vector<8x4xf32> to vector<8x4xbf16>
    %cst_7 = arith.constant dense<0.000000e+00> : vector<64x8xf32>
    %7 = tpu.matmul %4, %6, %cst_7 {dimension_numbers = #tpu.dot_dimension_numbers<[1], [1], [0], [0], [0, 0, 1, 0], [], []>} : vector<64x4xbf16>, vector<8x4xbf16>, vector<64x8xf32> -> vector<64x8xf32>
    %8 = arith.addf %3, %7 : vector<64x8xf32>
    %c0_8 = arith.constant 0 : index
    %c0_9 = arith.constant 0 : index
    %9 = vector.load %arg5[%c0_8, %c0_9] : memref<64x1xf32, #tpu.memory_space<vmem>>, vector<64x1xf32>
    %10 = vector.broadcast %9 : vector<64x1xf32> to vector<64x8xf32>
    %11 = arith.addf %8, %10 : vector<64x8xf32>
    %cst_10 = arith.constant 0.000000e+00 : f32
    %12 = vector.broadcast %cst_10 : f32 to vector<64x8xf32>
    %13 = arith.maximumf %11, %12 : vector<64x8xf32>
    %c0_11 = arith.constant 0 : index
    %c0_12 = arith.constant 0 : index
    %14 = vector.load %arg6[%c0_11, %c0_12] : memref<64x64xbf16, #tpu.memory_space<vmem>>, vector<64x64xbf16>
    %15 = arith.truncf %13 : vector<64x8xf32> to vector<64x8xbf16>
    %cst_13 = arith.constant dense<0.000000e+00> : vector<64x8xf32>
    %16 = tpu.matmul %14, %15, %cst_13 {dimension_numbers = #tpu.dot_dimension_numbers<[1], [0], [0], [1], [0, 0, 1, 1], [], []>} : vector<64x64xbf16>, vector<64x8xbf16>, vector<64x8xf32> -> vector<64x8xf32>
    %c0_14 = arith.constant 0 : index
    %c0_15 = arith.constant 0 : index
    %17 = vector.load %arg7[%c0_14, %c0_15] : memref<64x1xf32, #tpu.memory_space<vmem>>, vector<64x1xf32>
    %18 = vector.broadcast %17 : vector<64x1xf32> to vector<64x8xf32>
    %19 = arith.addf %16, %18 : vector<64x8xf32>
    %cst_16 = arith.constant 0.000000e+00 : f32
    %20 = vector.broadcast %cst_16 : f32 to vector<64x8xf32>
    %21 = arith.maximumf %19, %20 : vector<64x8xf32>
    %c0_17 = arith.constant 0 : index
    %c0_18 = arith.constant 0 : index
    %22 = vector.load %arg8[%c0_17, %c0_18] : memref<64x1xf32, #tpu.memory_space<vmem>>, vector<64x1xf32>
    %23 = vector.broadcast %22 : vector<64x1xf32> to vector<64x8xf32>
    %24 = arith.mulf %21, %23 : vector<64x8xf32>
    %cst_19 = arith.constant dense<0.000000e+00> : vector<8xf32>
    %25 = vector.multi_reduction <add>, %24, %cst_19 [0] : vector<64x8xf32> to vector<8xf32>
    %26 = vector.shape_cast %25 : vector<8xf32> to vector<1x8xf32>
    %c0_20 = arith.constant 0 : index
    %c0_21 = arith.constant 0 : index
    %27 = vector.load %arg9[%c0_20, %c0_21] : memref<1x1xf32, #tpu.memory_space<vmem>>, vector<1x1xf32>
    %28 = vector.broadcast %27 : vector<1x1xf32> to vector<1x8xf32>
    %29 = arith.addf %26, %28 : vector<1x8xf32>
    %c0_22 = arith.constant 0 : index
    %c0_23 = arith.constant 0 : index
    %30 = vector.load %arg10[%c0_22, %c0_23] : memref<1x8xf32, #tpu.memory_space<vmem>>, vector<1x8xf32>
    tpu.vector_store %arg10[%c0_22, %c0_23], %29 {strides = array<i32>} : memref<1x8xf32, #tpu.memory_space<vmem>>, vector<1x8xf32>,
    return
  }
  func.func @transform_0(%arg0: i32) -> (i32, i32) {
    %c0_i32 = arith.constant 0 : i32
    %c0_i32_0 = arith.constant 0 : i32
    return %arg0, %c0_i32 : i32, i32
  }
  func.func @transform_1(%arg0: i32) -> (i32, i32) {
    %c0_i32 = arith.constant 0 : i32
    %c0_i32_0 = arith.constant 0 : i32
    return %arg0, %c0_i32 : i32, i32
  }
  func.func @transform_2(%arg0: i32) -> (i32, i32) {
    %c0_i32 = arith.constant 0 : i32
    %c0_i32_0 = arith.constant 0 : i32
    %c0_i32_1 = arith.constant 0 : i32
    return %c0_i32, %c0_i32_0 : i32, i32
  }
  func.func @transform_3(%arg0: i32) -> (i32, i32) {
    %c0_i32 = arith.constant 0 : i32
    %c0_i32_0 = arith.constant 0 : i32
    %c0_i32_1 = arith.constant 0 : i32
    return %c0_i32, %c0_i32_0 : i32, i32
  }
  func.func @transform_4(%arg0: i32) -> (i32, i32) {
    %c0_i32 = arith.constant 0 : i32
    %c0_i32_0 = arith.constant 0 : i32
    %c0_i32_1 = arith.constant 0 : i32
    return %c0_i32, %c0_i32_0 : i32, i32
  }
  func.func @transform_5(%arg0: i32) -> (i32, i32) {
    %c0_i32 = arith.constant 0 : i32
    %c0_i32_0 = arith.constant 0 : i32
    %c0_i32_1 = arith.constant 0 : i32
    return %c0_i32, %c0_i32_0 : i32, i32
  }
  func.func @transform_6(%arg0: i32) -> (i32, i32) {
    %c0_i32 = arith.constant 0 : i32
    %c0_i32_0 = arith.constant 0 : i32
    %c0_i32_1 = arith.constant 0 : i32
    return %c0_i32, %c0_i32_0 : i32, i32
  }
  func.func @transform_7(%arg0: i32) -> (i32, i32) {
    %c0_i32 = arith.constant 0 : i32
    %c0_i32_0 = arith.constant 0 : i32
    %c0_i32_1 = arith.constant 0 : i32
    return %c0_i32, %c0_i32_0 : i32, i32
  }
  func.func @transform_8(%arg0: i32) -> (i32, i32) {
    %c0_i32 = arith.constant 0 : i32
    %c0_i32_0 = arith.constant 0 : i32
    %c0_i32_1 = arith.constant 0 : i32
    return %c0_i32, %c0_i32_0 : i32, i32
  }
  func.func @transform_9(%arg0: i32) -> (i32, i32) {
    %c0_i32 = arith.constant 0 : i32
    %c0_i32_0 = arith.constant 0 : i32
    return %c0_i32, %arg0 : i32, i32
  }
}

</mosaic_0001>

<llo_original>
// kernel: tpu_custom_call.1
$region0: #{tpu_custom_call.1}
  #allocation0 [shape = 'u32[]', space=smem, size = 0x4, offset = 0x4, fixed_abs, tag = 'smem constant byte address 0x4 - core index']
  #allocation1 [shape = 'u32[72,128]{1,0:T(1,128)}', space=vmem, size = 0x9000, scoped, tag = 'internal scratch']
  #allocation2 [shape = 'f32[1,1]{1,0:T(1,128)S(1)}', space=vmem, size = 0x200, scoped, tag = 'scoped memory for tpu_custom_call.1']
  %s0 = inlined_call_operand.vmem [shape: f32[8,12], index: 0, kind: input, shape index: {}]
  %s1 = inlined_call_operand.vmem [shape: f32[8,4], index: 1, kind: input, shape index: {}]
  %s2 = inlined_call_operand.vmem [shape: bf16[64,12], index: 2, kind: input, shape index: {}]
  %s3 = inlined_call_operand.vmem [shape: bf16[64,4], index: 3, kind: input, shape index: {}]
  %s4 = inlined_call_operand.vmem [shape: f32[64,1], index: 4, kind: input, shape index: {}]
  %s5 = inlined_call_operand.vmem [shape: bf16[64,64], index: 5, kind: input, shape index: {}]
  %s6 = inlined_call_operand.vmem [shape: f32[64,1], index: 6, kind: input, shape index: {}]
  %s7 = inlined_call_operand.vmem [shape: f32[64,1], index: 7, kind: input, shape index: {}]
  %s8 = inlined_call_operand.<no memory space> [shape: f32[1,1], index: 8, kind: input, shape index: {}]
  %s9 = inlined_call_operand.hbm [shape: f32[1,8], index: 9, kind: output, shape index: {}]
  %s10 = sld [smem:[#allocation0]]
  $region46: #{tpu_custom_call.1} parent=0
    _
  %s12 = ssub.s32 1, %s10
  %s13 = scalar_select 0, %s12, %s10
  %v14 = vstv %s8
  %15 = vst [vmem:[#allocation2] sm:$0x1] %v14
  $region1: #{tpu_custom_call.1} parent=0
    #allocation3 [shape = 'u8[512]{0}', space=vmem, size = 0x400, scoped, tag = 'output window, operand 0, single buffered']
    #allocation4 [shape = 's32[1]{0}', space=sflag, size = 0x4, scoped, tag = 'scoped memory for tpu_custom_call.1']
    %16 = vsyncpa [#allocation4], 0
    // Predicated region
    $region2: #{tpu_custom_call.1} parent=1 // pred_check
      _
    $region3: #{tpu_custom_call.1} parent=1 // pred_check_branch
      %18 = sbr.rel (0) target = $region5
    $region4: #{tpu_custom_call.1} parent=1 // pred_region
      _
    $region5: #{tpu_custom_call.1} parent=1 // pred_fallthru
      _
    // Predicated region
    $region6: #{tpu_custom_call.1} parent=1 // pred_check
      _
    $region7: #{tpu_custom_call.1} parent=1 // pred_check_branch
      %20 = sbr.rel (0) target = $region9
    $region8: #{tpu_custom_call.1} parent=1 // pred_region
      _
    $region9: #{tpu_custom_call.1} parent=1 // pred_fallthru
      _
    // Predicated region
    $region10: #{tpu_custom_call.1} parent=1 // pred_check
      _
    $region11: #{tpu_custom_call.1} parent=1 // pred_check_branch
      %22 = sbr.rel (0) target = $region13
    $region12: #{tpu_custom_call.1} parent=1 // pred_region
      _
    $region13: #{tpu_custom_call.1} parent=1 // pred_fallthru
      _
    // Predicated region
    $region14: #{tpu_custom_call.1} parent=1 // pred_check
      _
    $region15: #{tpu_custom_call.1} parent=1 // pred_check_branch
      %24 = sbr.rel (0) target = $region17
    $region16: #{tpu_custom_call.1} parent=1 // pred_region
      _
    $region17: #{tpu_custom_call.1} parent=1 // pred_fallthru
      _
    // Predicated region
    $region18: #{tpu_custom_call.1} parent=1 // pred_check
      _
    $region19: #{tpu_custom_call.1} parent=1 // pred_check_branch
      %26 = sbr.rel (0) target = $region21
    $region20: #{tpu_custom_call.1} parent=1 // pred_region
      _
    $region21: #{tpu_custom_call.1} parent=1 // pred_fallthru
      _
    // Predicated region
    $region22: #{tpu_custom_call.1} parent=1 // pred_check
      _
    $region23: #{tpu_custom_call.1} parent=1 // pred_check_branch
      %28 = sbr.rel (0) target = $region25
    $region24: #{tpu_custom_call.1} parent=1 // pred_region
      _
    $region25: #{tpu_custom_call.1} parent=1 // pred_fallthru
      _
    // Predicated region
    $region26: #{tpu_custom_call.1} parent=1 // pred_check
      _
    $region27: #{tpu_custom_call.1} parent=1 // pred_check_branch
      %30 = sbr.rel (0) target = $region29
    $region28: #{tpu_custom_call.1} parent=1 // pred_region
      _
    $region29: #{tpu_custom_call.1} parent=1 // pred_fallthru
      _
    // Predicated region
    $region30: #{tpu_custom_call.1} parent=1 // pred_check
      _
    $region31: #{tpu_custom_call.1} parent=1 // pred_check_branch
      %32 = sbr.rel (0) target = $region33
    $region32: #{tpu_custom_call.1} parent=1 // pred_region
      _
    $region33: #{tpu_custom_call.1} parent=1 // pred_fallthru
      _
    // Predicated region
    $region34: #{tpu_custom_call.1} parent=1 // pred_check
      _
    $region35: #{tpu_custom_call.1} parent=1 // pred_check_branch
      %34 = sbr.rel (0) target = $region37
    $region36: #{tpu_custom_call.1} parent=1 // pred_region
      _
    $region37: #{tpu_custom_call.1} parent=1 // pred_fallthru
      _
    %v36 = vld [vmem:[%s2] sm:$0xf]
    %v37 = vld [vmem:[%s2 + $0x4] sm:$0xf]
    %v38 = vld [vmem:[%s2 + $0x8] sm:$0xf]
    %v39 = vld [vmem:[%s2 + $0xc] sm:$0xf]
    %v40 = vld [vmem:[%s2 + $0x10] sm:$0xf]
    %v41 = vld [vmem:[%s2 + $0x14] sm:$0xf]
    %v42 = vld [vmem:[%s2 + $0x18] sm:$0xf]
    %v43 = vld [vmem:[%s2 + $0x1c] sm:$0xf]
    %v44 = vld [vmem:[%s0] sm:$0xff]
    %v45 = vpack.c.bf16 %v44, %v44
    %v46 = vld [vmem:[%s3] sm:$0xf]
    %v47 = vld [vmem:[%s3 + $0x4] sm:$0xf]
    %v48 = vld [vmem:[%s3 + $0x8] sm:$0xf]
    %v49 = vld [vmem:[%s3 + $0xc] sm:$0xf]
    %v50 = vld [vmem:[%s3 + $0x10] sm:$0xf]
    %v51 = vld [vmem:[%s3 + $0x14] sm:$0xf]
    %v52 = vld [vmem:[%s3 + $0x18] sm:$0xf]
    %v53 = vld [vmem:[%s3 + $0x1c] sm:$0xf]
    %v54 = vld [vmem:[%s1] sm:$0xff]
    %v55 = vpack.c.bf16 %v54, %v54
    %v64 = vunpack.c.l.b16 %v46
    %v65 = vunpack.c.l.b16 %v47
    %v66 = vunpack.c.l.b16 %v48
    %v67 = vunpack.c.l.b16 %v49
    %v68 = vunpack.c.l.b16 %v50
    %v69 = vunpack.c.l.b16 %v51
    %v70 = vunpack.c.l.b16 %v52
    %v71 = vunpack.c.l.b16 %v53
    %v72 = vpack.c.b16 %v65, %v64
    %v73 = vpack.c.b16 %v67, %v66
    %v74 = vpack.c.b16 %v69, %v68
    %v75 = vpack.c.b16 %v71, %v70
    %vm76 = vcmask 31744
    %v78 = vsel %vm76, %v72, 0
    %v81 = vsel %vm76, %v73, 0
    %v84 = vsel %vm76, %v74, 0
    %v87 = vsel %vm76, %v75, 0
    %v90 = vsel %vm76, %v55, 0
    %92 = vmatpush.bf16.xpose.msra.mxu0 0
    %93 = vmatpush.bf16.xpose.msra.mxu0 0
    %94 = vmatpush.bf16.xpose.msra.mxu0 0
    %95 = vmatpush.bf16.xpose.msra.mxu0 0
    %96 = vmatpush.bf16.xpose.msra.mxu0 0
    %97 = vmatpush.bf16.xpose.msra.mxu0 0
    %98 = vmatpush.bf16.xpose.msra.mxu0 0
    %99 = vmatpush.bf16.xpose.msra.mxu0 %v90
    %100 = vmatmul.bf16.gmra.mxu0 %v78
    %v101 = vpop.f32.mrf.mxu0
    %v102 = vadd.f32 0.0, %v101
    %v103 = vpop.f32.mrf.mxu0
    %v104 = vadd.f32 0.0, %v103
    %105 = vmatmul.bf16.gmra.mxu0 %v81
    %v106 = vpop.f32.mrf.mxu0
    %v107 = vadd.f32 0.0, %v106
    %v108 = vpop.f32.mrf.mxu0
    %v109 = vadd.f32 0.0, %v108
    %110 = vmatmul.bf16.gmra.mxu0 %v84
    %v111 = vpop.f32.mrf.mxu0
    %v112 = vadd.f32 0.0, %v111
    %v113 = vpop.f32.mrf.mxu0
    %v114 = vadd.f32 0.0, %v113
    %115 = vmatmul.bf16.gmra.mxu0 %v87
    %v116 = vpop.f32.mrf.mxu0
    %v117 = vadd.f32 0.0, %v116
    %v118 = vpop.f32.mrf.mxu0
    %v119 = vadd.f32 0.0, %v118
    %120 = vdwg.mxu0
    %v129 = vunpack.c.l.b16 %v36
    %v130 = vunpack.c.l.b16 %v37
    %v131 = vunpack.c.l.b16 %v38
    %v132 = vunpack.c.l.b16 %v39
    %v133 = vunpack.c.l.b16 %v40
    %v134 = vunpack.c.l.b16 %v41
    %v135 = vunpack.c.l.b16 %v42
    %v136 = vunpack.c.l.b16 %v43
    %v137 = vpack.c.b16 %v130, %v129
    %v138 = vpack.c.b16 %v132, %v131
    %v139 = vpack.c.b16 %v134, %v133
    %v140 = vpack.c.b16 %v136, %v135
    %vm141 = vcmask 97280
    %v143 = vsel %vm141, %v137, 0
    %v146 = vsel %vm141, %v138, 0
    %v149 = vsel %vm141, %v139, 0
    %v152 = vsel %vm141, %v140, 0
    %v155 = vsel %vm141, %v45, 0
    %157 = vmatpush.bf16.xpose.msra.mxu0 0
    %158 = vmatpush.bf16.xpose.msra.mxu0 0
    %159 = vmatpush.bf16.xpose.msra.mxu0 0
    %160 = vmatpush.bf16.xpose.msra.mxu0 0
    %161 = vmatpush.bf16.xpose.msra.mxu0 0
    %162 = vmatpush.bf16.xpose.msra.mxu0 0
    %163 = vmatpush.bf16.xpose.msra.mxu0 0
    %164 = vmatpush.bf16.xpose.msra.mxu0 %v155
    %165 = vmatmul.bf16.gmra.mxu0 %v143
    %v166 = vpop.f32.mrf.mxu0
    %v167 = vadd.f32 %v102, %v166
    %v168 = vpop.f32.mrf.mxu0
    %v169 = vadd.f32 %v104, %v168
    %170 = vmatmul.bf16.gmra.mxu0 %v146
    %v171 = vpop.f32.mrf.mxu0
    %v172 = vadd.f32 %v107, %v171
    %v173 = vpop.f32.mrf.mxu0
    %v174 = vadd.f32 %v109, %v173
    %175 = vmatmul.bf16.gmra.mxu0 %v149
    %v176 = vpop.f32.mrf.mxu0
    %v177 = vadd.f32 %v112, %v176
    %v178 = vpop.f32.mrf.mxu0
    %v179 = vadd.f32 %v114, %v178
    %180 = vmatmul.bf16.gmra.mxu0 %v152
    %v181 = vpop.f32.mrf.mxu0
    %v182 = vadd.f32 %v117, %v181
    %v183 = vpop.f32.mrf.mxu0
    %v184 = vadd.f32 %v119, %v183
    %185 = vdwg.mxu0
    %v186 = vld [vmem:[%s4] sm:$0xff]
    %v187 = vld [vmem:[%s4 + $0x8] sm:$0xff]
    %v188 = vld [vmem:[%s4 + $0x10] sm:$0xff]
    %v189 = vld [vmem:[%s4 + $0x18] sm:$0xff]
    %v190 = vld [vmem:[%s4 + $0x20] sm:$0xff]
    %v191 = vld [vmem:[%s4 + $0x28] sm:$0xff]
    %v192 = vld [vmem:[%s4 + $0x30] sm:$0xff]
    %v193 = vld [vmem:[%s4 + $0x38] sm:$0xff]
    %195 = vset.pattern.permute.xlu0 0
    %196 = vperm.xlu0 %195, %v186
    %v197 = vpop.permute.xlu0 %196
    %200 = vset.pattern.permute.xlu0 0
    %201 = vperm.xlu0 %200, %v187
    %v202 = vpop.permute.xlu0 %201
    %205 = vset.pattern.permute.xlu0 0
    %206 = vperm.xlu0 %205, %v188
    %v207 = vpop.permute.xlu0 %206
    %210 = vset.pattern.permute.xlu0 0
    %211 = vperm.xlu0 %210, %v189
    %v212 = vpop.permute.xlu0 %211
    %215 = vset.pattern.permute.xlu0 0
    %216 = vperm.xlu0 %215, %v190
    %v217 = vpop.permute.xlu0 %216
    %220 = vset.pattern.permute.xlu0 0
    %221 = vperm.xlu0 %220, %v191
    %v222 = vpop.permute.xlu0 %221
    %225 = vset.pattern.permute.xlu0 0
    %226 = vperm.xlu0 %225, %v192
    %v227 = vpop.permute.xlu0 %226
    %230 = vset.pattern.permute.xlu0 0
    %231 = vperm.xlu0 %230, %v193
    %v232 = vpop.permute.xlu0 %231
    %v234 = vadd.f32 %v167, %v197
    %v235 = vadd.f32 %v169, %v202
    %v236 = vadd.f32 %v172, %v207
    %v237 = vadd.f32 %v174, %v212
    %v238 = vadd.f32 %v177, %v217
    %v239 = vadd.f32 %v179, %v222
    %v240 = vadd.f32 %v182, %v227
    %v241 = vadd.f32 %v184, %v232
    %v242 = vmax.f32 %v234, 0.0
    %v243 = vmax.f32 %v235, 0.0
    %v244 = vmax.f32 %v236, 0.0
    %v245 = vmax.f32 %v237, 0.0
    %v246 = vmax.f32 %v238, 0.0
    %v247 = vmax.f32 %v239, 0.0
    %v248 = vmax.f32 %v240, 0.0
    %v249 = vmax.f32 %v241, 0.0
    %v250 = vld [vmem:[%s5] sm:$0xf]
    %v251 = vld [vmem:[%s5 + $0x4] sm:$0xf]
    %v252 = vld [vmem:[%s5 + $0x8] sm:$0xf]
    %v253 = vld [vmem:[%s5 + $0xc] sm:$0xf]
    %v254 = vld [vmem:[%s5 + $0x10] sm:$0xf]
    %v255 = vld [vmem:[%s5 + $0x14] sm:$0xf]
    %v256 = vld [vmem:[%s5 + $0x18] sm:$0xf]
    %v257 = vld [vmem:[%s5 + $0x1c] sm:$0xf]
    %v258 = vpack.c.bf16 %v243, %v242
    %v259 = vpack.c.bf16 %v245, %v244
    %v260 = vpack.c.bf16 %v247, %v246
    %v261 = vpack.c.bf16 %v249, %v248
    %v262 = vld [vmem:[%s6] sm:$0xff]
    %v263 = vld [vmem:[%s6 + $0x8] sm:$0xff]
    %v264 = vld [vmem:[%s6 + $0x10] sm:$0xff]
    %v265 = vld [vmem:[%s6 + $0x18] sm:$0xff]
    %v266 = vld [vmem:[%s6 + $0x20] sm:$0xff]
    %v267 = vld [vmem:[%s6 + $0x28] sm:$0xff]
    %v268 = vld [vmem:[%s6 + $0x30] sm:$0xff]
    %v269 = vld [vmem:[%s6 + $0x38] sm:$0xff]
    %271 = vset.pattern.permute.xlu0 0
    %272 = vperm.xlu0 %271, %v262
    %v273 = vpop.permute.xlu0 %272
    %276 = vset.pattern.permute.xlu0 0
    %277 = vperm.xlu0 %276, %v263
    %v278 = vpop.permute.xlu0 %277
    %281 = vset.pattern.permute.xlu0 0
    %282 = vperm.xlu0 %281, %v264
    %v283 = vpop.permute.xlu0 %282
    %286 = vset.pattern.permute.xlu0 0
    %287 = vperm.xlu0 %286, %v265
    %v288 = vpop.permute.xlu0 %287
    %291 = vset.pattern.permute.xlu0 0
    %292 = vperm.xlu0 %291, %v266
    %v293 = vpop.permute.xlu0 %292
    %296 = vset.pattern.permute.xlu0 0
    %297 = vperm.xlu0 %296, %v267
    %v298 = vpop.permute.xlu0 %297
    %301 = vset.pattern.permute.xlu0 0
    %302 = vperm.xlu0 %301, %v268
    %v303 = vpop.permute.xlu0 %302
    %306 = vset.pattern.permute.xlu0 0
    %307 = vperm.xlu0 %306, %v269
    %v308 = vpop.permute.xlu0 %307
    %v318 = vunpack.c.l.b16 %v250
    %v319 = vunpack.c.l.b16 %v251
    %v320 = vunpack.c.l.b16 %v252
    %v321 = vunpack.c.l.b16 %v253
    %v322 = vunpack.c.l.b16 %v254
    %v323 = vunpack.c.l.b16 %v255
    %v324 = vunpack.c.l.b16 %v256
    %v325 = vunpack.c.l.b16 %v257
    %v326 = vpack.c.b16 %v319, %v318
    %v327 = vpack.c.b16 %v321, %v320
    %v328 = vpack.c.b16 %v323, %v322
    %v329 = vpack.c.b16 %v325, %v324
    %vm330 = vcmask 523264
    %v332 = vsel %vm330, %v326, 0
    %v335 = vsel %vm330, %v327, 0
    %v338 = vsel %vm330, %v328, 0
    %v341 = vsel %vm330, %v329, 0
    %343 = vmatpush.bf16.msra.mxu0 0
    %344 = vmatpush.bf16.msra.mxu0 0
    %345 = vmatpush.bf16.msra.mxu0 0
    %346 = vmatpush.bf16.msra.mxu0 0
    %347 = vmatpush.bf16.msra.mxu0 %v261
    %348 = vmatpush.bf16.msra.mxu0 %v260
    %349 = vmatpush.bf16.msra.mxu0 %v259
    %350 = vmatpush.bf16.msra.mxu0 %v258
    %351 = vmatmul.bf16.gmra.mxu0 %v332
    %v352 = vpop.f32.mrf.mxu0
    %v353 = vadd.f32 %v273, %v352
    %v354 = vpop.f32.mrf.mxu0
    %v355 = vadd.f32 %v278, %v354
    %356 = vmatmul.bf16.gmra.mxu0 %v335
    %v357 = vpop.f32.mrf.mxu0
    %v358 = vadd.f32 %v283, %v357
    %v359 = vpop.f32.mrf.mxu0
    %v360 = vadd.f32 %v288, %v359
    %361 = vmatmul.bf16.gmra.mxu0 %v338
    %v362 = vpop.f32.mrf.mxu0
    %v363 = vadd.f32 %v293, %v362
    %v364 = vpop.f32.mrf.mxu0
    %v365 = vadd.f32 %v298, %v364
    %366 = vmatmul.bf16.gmra.mxu0 %v341
    %v367 = vpop.f32.mrf.mxu0
    %v368 = vadd.f32 %v303, %v367
    %v369 = vpop.f32.mrf.mxu0
    %v370 = vadd.f32 %v308, %v369
    %371 = vdwg.mxu0
    %v372 = vmax.f32 %v353, 0.0
    %v373 = vmax.f32 %v355, 0.0
    %v374 = vmax.f32 %v358, 0.0
    %v375 = vmax.f32 %v360, 0.0
    %v376 = vmax.f32 %v363, 0.0
    %v377 = vmax.f32 %v365, 0.0
    %v378 = vmax.f32 %v368, 0.0
    %v379 = vmax.f32 %v370, 0.0
    %v380 = vld [vmem:[%s7] sm:$0xff]
    %v381 = vld [vmem:[%s7 + $0x8] sm:$0xff]
    %v382 = vld [vmem:[%s7 + $0x10] sm:$0xff]
    %v383 = vld [vmem:[%s7 + $0x18] sm:$0xff]
    %v384 = vld [vmem:[%s7 + $0x20] sm:$0xff]
    %v385 = vld [vmem:[%s7 + $0x28] sm:$0xff]
    %v386 = vld [vmem:[%s7 + $0x30] sm:$0xff]
    %v387 = vld [vmem:[%s7 + $0x38] sm:$0xff]
    %389 = vset.pattern.permute.xlu0 0
    %390 = vperm.xlu0 %389, %v380
    %v391 = vpop.permute.xlu0 %390
    %394 = vset.pattern.permute.xlu0 0
    %395 = vperm.xlu0 %394, %v381
    %v396 = vpop.permute.xlu0 %395
    %399 = vset.pattern.permute.xlu0 0
    %400 = vperm.xlu0 %399, %v382
    %v401 = vpop.permute.xlu0 %400
    %404 = vset.pattern.permute.xlu0 0
    %405 = vperm.xlu0 %404, %v383
    %v406 = vpop.permute.xlu0 %405
    %409 = vset.pattern.permute.xlu0 0
    %410 = vperm.xlu0 %409, %v384
    %v411 = vpop.permute.xlu0 %410
    %414 = vset.pattern.permute.xlu0 0
    %415 = vperm.xlu0 %414, %v385
    %v416 = vpop.permute.xlu0 %415
    %419 = vset.pattern.permute.xlu0 0
    %420 = vperm.xlu0 %419, %v386
    %v421 = vpop.permute.xlu0 %420
    %424 = vset.pattern.permute.xlu0 0
    %425 = vperm.xlu0 %424, %v387
    %v426 = vpop.permute.xlu0 %425
    %v428 = vmul.f32 %v372, %v391
    %v429 = vmul.f32 %v373, %v396
    %v430 = vmul.f32 %v374, %v401
    %v431 = vmul.f32 %v375, %v406
    %v432 = vmul.f32 %v376, %v411
    %v433 = vmul.f32 %v377, %v416
    %v434 = vmul.f32 %v378, %v421
    %v435 = vmul.f32 %v379, %v426
    %vm436 = vcmask 64512
    %v437 = vsel %vm436, %v428, 0.0
    %v438 = vsel %vm436, %v429, 0.0
    %v439 = vadd.f32 %v437, %v438
    %v440 = vsel %vm436, %v430, 0.0
    %v441 = vadd.f32 %v439, %v440
    %v442 = vsel %vm436, %v431, 0.0
    %v443 = vadd.f32 %v441, %v442
    %v444 = vsel %vm436, %v432, 0.0
    %v445 = vadd.f32 %v443, %v444
    %v446 = vsel %vm436, %v433, 0.0
    %v447 = vadd.f32 %v445, %v446
    %v448 = vsel %vm436, %v434, 0.0
    %v449 = vadd.f32 %v447, %v448
    %v450 = vsel %vm436, %v435, 0.0
    %v451 = vadd.f32 %v449, %v450
    %v452 = vrot.slane %v451, 4
    %v453 = vadd.f32 %v451, %v452
    %v454 = vrot.slane %v453, 2
    %v455 = vadd.f32 %v453, %v454
    %v456 = vrot.slane %v455, 1
    %v457 = vadd.f32 %v455, %v456
    %v458 = vld [vmem:[#allocation2] sm:$0x1]
    %460 = vset.pattern.permute.xlu0 0
    %461 = vperm.xlu0 %460, %v458
    %v462 = vpop.permute.xlu0 %461
    %v464 = vperm.slane %v462, 0
    %v465 = vadd.f32 %v457, %v464
    %vm466 = vcmask 57344
    %467 = vst.msk [vmem:[#allocation3] sm:$0x1] %vm466, %v465
    // Predicated region
    $region38: #{tpu_custom_call.1} parent=1 // pred_check
      _
    $region39: #{tpu_custom_call.1} parent=1 // pred_check_branch
      %469 = sbr.rel (0) target = $region41
    $region40: #{tpu_custom_call.1} parent=1 // pred_region
      %471 = vsyncadd [#allocation4], 0
      %s473 = sshll.u32 [#allocation3], 4
      %s474 = int_to_ptr.vmem [resolvable:$true] %s473
      %s475 = sshll.u32 %s9, 4
      %s476 = int_to_ptr.hbm [resolvable:$true] %s475
      %478 = dma.vmem_to_hbm [thread:$0]  %s474, 16, %s476, [#allocation4]
    $region41: #{tpu_custom_call.1} parent=1 // pred_fallthru
      _
    // Predicated region
    $region42: #{tpu_custom_call.1} parent=1 // pred_check
      _
    $region43: #{tpu_custom_call.1} parent=1 // pred_check_branch
      %480 = sbr.rel (0) target = $region45
    $region44: #{tpu_custom_call.1} parent=1 // pred_region
      %482 = dma.done [#allocation4], 16
    $region45: #{tpu_custom_call.1} parent=1 // pred_fallthru
      _
    %483 = vsyncpa [#allocation4], 1

</llo_original>
